<compile_context>
chip_gen: v7x
topology: tpu7x:2x2x1
jax: 0.10.0
libtpu: 0.0.40
codegen_flags: <defaults>
</compile_context>

<pallas_src>
import functools

import jax
import jax.numpy as jnp
from jax.experimental import pallas as pl
from jax.experimental.pallas import tpu as pltpu


def _mixture_component_kernel(x_ref, w1_ref, w2_ref, wta_ref,
                              tastes_ref, attn_ref):
    cd = tastes_ref.shape[-1]                               # C * D (static)
    x = x_ref[...]                                          # (TB, D)

    # Two bias-free Linear layers + ReLU (MXU matmul, f32 accumulate; ReLU is
    # a cheap VPU max and stays in f32 — v5e has no bf16 VPU).
    h = jnp.maximum(
        jnp.dot(x, w1_ref[...], preferred_element_type=jnp.float32), 0.0)
    h = jnp.maximum(
        jnp.dot(h, w2_ref[...], preferred_element_type=jnp.float32), 0.0)

    # Fused taste|attention projection: one MXU pass -> (TB, 2*C*D).
    # The split at lane `cd` (a multiple of 128 here) keeps both stores
    # unmasked / lane-dense.
    out = jnp.dot(h, wta_ref[...], preferred_element_type=jnp.float32)
    tastes_ref[...] = out[:, :cd].astype(tastes_ref.dtype)
    attn_ref[...] = out[:, cd:].astype(attn_ref.dtype)


def _round_up(x, m):
    return ((x + m - 1) // m) * m


@functools.partial(
    jax.jit, static_argnames=("num_components", "block_b", "out_dtype"))
def mixture_component_pallas(x, w1_t, w2_t, wt_t, wa_t, *,
                             num_components, block_b=1024, out_dtype=None):
    """x: (B, D). w*_t are pre-transposed (in_features, out_features).

    block_b: batch tile (primary knob). 1024 is a good universal default;
    2048-4096 recovers a further ~15-20% on v7x; 512-1024 is already near
    the roofline on v5e.
    """
    B, D = x.shape
    C = num_components
    CD = wt_t.shape[1]
    assert CD == C * D and wa_t.shape == (D, CD)
    assert w1_t.shape == (D, D) and w2_t.shape == (D, D)
    if out_dtype is None:
        out_dtype = x.dtype
    out_dtype = jnp.dtype(out_dtype)

    # Fuse the two projection weights into one resident (D, 2*CD) block so a
    # single MXU pass serves both outputs (256 output lanes per pass).
    wta_t = jnp.concatenate([wt_t, wa_t], axis=1)           # (D, 2*CD)

    # Batch tile: multiple of 8 (sublane), capped at block_b.  No padding:
    # Pallas handles the partial trailing batch block (masked boundary DMA),
    # so we avoid the pad + [:B]-slice copy of the (memory-dominant) outputs.
    TB = min(block_b, _round_up(B, 8))
    grid = (pl.cdiv(B, TB),)

    # VMEM budget derived from TB: double-buffered input/output tiles +
    # in-kernel intermediates + resident weights + headroom.  (Replaces the
    # old hard 8 MiB cap that limited tile size.)
    in_item = x.dtype.itemsize
    out_item = out_dtype.itemsize
    per_step_io = TB * D * in_item + 2 * TB * CD * out_item
    intermediates = TB * (D + D + 2 * CD) * 4               # h1, h2, fused out (f32)
    weights = (2 * D * D + D * 2 * CD) * w1_t.dtype.itemsize
    vmem_bytes = 2 * per_step_io + intermediates + weights + (2 << 20)
    vmem_limit = int(min(max(vmem_bytes, 16 << 20), 64 << 20))

    tastes_flat, attn_flat = pl.pallas_call(
        _mixture_component_kernel,
        out_shape=(
            jax.ShapeDtypeStruct((B, CD), out_dtype),
            jax.ShapeDtypeStruct((B, CD), out_dtype),
        ),
        grid=grid,
        in_specs=[
            pl.BlockSpec((TB, D), lambda i: (i, 0)),        # x tile (batch-indexed)
            pl.BlockSpec((D, D), lambda i: (0, 0)),         # W1 (resident)
            pl.BlockSpec((D, D), lambda i: (0, 0)),         # W2 (resident)
            pl.BlockSpec((D, 2 * CD), lambda i: (0, 0)),    # fused Wt|Wa (resident)
        ],
        out_specs=(
            pl.BlockSpec((TB, CD), lambda i: (i, 0)),       # lane-dense (TB, C*D)
            pl.BlockSpec((TB, CD), lambda i: (i, 0)),
        ),
        compiler_params=pltpu.CompilerParams(
            dimension_semantics=("parallel",),              # megacore on v7x
            vmem_limit_bytes=vmem_limit,
        ),
    )(x, w1_t, w2_t, wta_t)

    # Trailing-dim split C*D -> (C, D) is a free, layout-compatible reshape.
    tastes = tastes_flat.reshape(B, C, D)
    attn = attn_flat.reshape(B, C, D)
    return tastes, attn


class MixtureComponentParams:
    """Deterministic parameter construction mirroring the PyTorch __init__.

    Weights are stored pre-transposed as (in_features, out_features) so the
    kernel computes x @ W directly (lane-dense outputs on the MXU).
    """

    def __init__(self, embedding_dim, num_components, key=None):
        self.embedding_dim = embedding_dim
        self.num_components = num_components
        if key is None:
            key = jax.random.PRNGKey(0)
        k1, k2, k3, k4 = jax.random.split(key, 4)
        D, C = embedding_dim, num_components
        scale = 1.0 / jnp.sqrt(jnp.float32(D))
        self.w1 = jax.random.normal(k1, (D, D), jnp.float32) * scale
        self.w2 = jax.random.normal(k2, (D, D), jnp.float32) * scale
        self.wt = jax.random.normal(k3, (D, D * C), jnp.float32) * scale
        self.wa = jax.random.normal(k4, (D, D * C), jnp.float32) * scale

    def forward(self, x, *, block_b=1024, out_dtype=None):
        return mixture_component_pallas(
            x, self.w1, self.w2, self.wt, self.wa,
            num_components=self.num_components, block_b=block_b,
            out_dtype=out_dtype)


def _reference_forward(params, x):
    """Pure-JAX reference reproducing the PyTorch forward."""
    hp = jax.lax.Precision.HIGHEST
    B, D = x.shape
    C = params.num_components
    h = jax.nn.relu(jnp.dot(x, params.w1, precision=hp))
    h = jax.nn.relu(jnp.dot(h, params.w2, precision=hp))
    tastes = jnp.dot(h, params.wt, precision=hp).reshape(B, C, D)
    attn = jnp.dot(h, params.wa, precision=hp).reshape(B, C, D)
    return tastes, attn


if __name__ == "__main__":
    embedding_dim, num_components = 32, 4
    batch = 20  # not a multiple of the tile -> exercises the partial trailing block

    key = jax.random.PRNGKey(0)
    k_params, k_x = jax.random.split(key)

    net = MixtureComponentParams(embedding_dim, num_components, key=k_params)
    x = jax.random.normal(k_x, (batch, embedding_dim), jnp.float32)

    # Small block_b so the demo runs a multi-step, pipelined grid with a
    # masked partial trailing batch block (production default is 1024).
    tastes, attn = net.forward(x, block_b=8)
    tastes = jax.block_until_ready(tastes)
    attn = jax.block_until_ready(attn)

    ref_tastes, ref_attn = _reference_forward(net, x)
    assert tastes.shape == (batch, num_components, embedding_dim)
    assert attn.shape == (batch, num_components, embedding_dim)
    assert jnp.allclose(tastes, ref_tastes, atol=1e-4, rtol=1e-4)
    assert jnp.allclose(attn, ref_attn, atol=1e-4, rtol=1e-4)

    print("KERNEL_OK")
</pallas_src>

<mosaic_0001>
module attributes {stable_mosaic.version = 11 : i64} {
  func.func @_mixture_component_kernel(%arg0: i32, %arg1: memref<8x32xf32, #tpu.memory_space<vmem>>, %arg2: memref<32x32xf32, #tpu.memory_space<vmem>>, %arg3: memref<32x32xf32, #tpu.memory_space<vmem>>, %arg4: memref<32x256xf32, #tpu.memory_space<vmem>>, %arg5: memref<8x128xf32, #tpu.memory_space<vmem>>, %arg6: memref<8x128xf32, #tpu.memory_space<vmem>>) attributes {dimension_semantics = [#tpu.dimension_semantics<parallel>], iteration_bounds = array<i64: 3>, scalar_prefetch = 0 : i64, scratch_operands = 0 : i64, tpu.core_type = #tpu.core_type<tc>, window_params = [{transform_indices = @transform_0, window_bounds = array<i64: 8, 32>}, {pipeline_mode = #tpu.pipeline_mode<synchronous>, transform_indices = @transform_1, window_bounds = array<i64: 32, 32>}, {pipeline_mode = #tpu.pipeline_mode<synchronous>, transform_indices = @transform_2, window_bounds = array<i64: 32, 32>}, {pipeline_mode = #tpu.pipeline_mode<synchronous>, transform_indices = @transform_3, window_bounds = array<i64: 32, 256>}, {transform_indices = @transform_4, window_bounds = array<i64: 8, 128>}, {transform_indices = @transform_5, window_bounds = array<i64: 8, 128>}]} {
    %c0 = arith.constant 0 : index
    %c0_0 = arith.constant 0 : index
    %0 = vector.load %arg1[%c0, %c0_0] : memref<8x32xf32, #tpu.memory_space<vmem>>, vector<8x32xf32>
    %c0_1 = arith.constant 0 : index
    %c0_2 = arith.constant 0 : index
    %1 = vector.load %arg2[%c0_1, %c0_2] : memref<32x32xf32, #tpu.memory_space<vmem>>, vector<32x32xf32>
    %cst = arith.constant dense<0.000000e+00> : vector<8x32xf32>
    %2 = tpu.matmul %0, %1, %cst {dimension_numbers = #tpu.dot_dimension_numbers<[1], [0], [0], [1], [0, 0, 1, 1], [], []>} : vector<8x32xf32>, vector<32x32xf32>, vector<8x32xf32> -> vector<8x32xf32>
    %cst_3 = arith.constant 0.000000e+00 : f32
    %3 = vector.broadcast %cst_3 : f32 to vector<8x32xf32>
    %4 = arith.maximumf %2, %3 : vector<8x32xf32>
    %c0_4 = arith.constant 0 : index
    %c0_5 = arith.constant 0 : index
    %5 = vector.load %arg3[%c0_4, %c0_5] : memref<32x32xf32, #tpu.memory_space<vmem>>, vector<32x32xf32>
    %cst_6 = arith.constant dense<0.000000e+00> : vector<8x32xf32>
    %6 = tpu.matmul %4, %5, %cst_6 {dimension_numbers = #tpu.dot_dimension_numbers<[1], [0], [0], [1], [0, 0, 1, 1], [], []>} : vector<8x32xf32>, vector<32x32xf32>, vector<8x32xf32> -> vector<8x32xf32>
    %cst_7 = arith.constant 0.000000e+00 : f32
    %7 = vector.broadcast %cst_7 : f32 to vector<8x32xf32>
    %8 = arith.maximumf %6, %7 : vector<8x32xf32>
    %c0_8 = arith.constant 0 : index
    %c0_9 = arith.constant 0 : index
    %9 = vector.load %arg4[%c0_8, %c0_9] : memref<32x256xf32, #tpu.memory_space<vmem>>, vector<32x256xf32>
    %cst_10 = arith.constant dense<0.000000e+00> : vector<8x256xf32>
    %10 = tpu.matmul %8, %9, %cst_10 {dimension_numbers = #tpu.dot_dimension_numbers<[1], [0], [0], [1], [0, 0, 1, 1], [], []>} : vector<8x32xf32>, vector<32x256xf32>, vector<8x256xf32> -> vector<8x256xf32>
    %11 = vector.extract_strided_slice %10 {offsets = [0, 0], sizes = [8, 128], strides = [1, 1]} : vector<8x256xf32> to vector<8x128xf32>
    %c0_11 = arith.constant 0 : index
    %c0_12 = arith.constant 0 : index
    %12 = vector.load %arg5[%c0_11, %c0_12] : memref<8x128xf32, #tpu.memory_space<vmem>>, vector<8x128xf32>
    tpu.vector_store %arg5[%c0_11, %c0_12], %11 {strides = array<i32>} : memref<8x128xf32, #tpu.memory_space<vmem>>, vector<8x128xf32>,
    %13 = vector.extract_strided_slice %10 {offsets = [0, 128], sizes = [8, 128], strides = [1, 1]} : vector<8x256xf32> to vector<8x128xf32>
    %c0_13 = arith.constant 0 : index
    %c0_14 = arith.constant 0 : index
    %14 = vector.load %arg6[%c0_13, %c0_14] : memref<8x128xf32, #tpu.memory_space<vmem>>, vector<8x128xf32>
    tpu.vector_store %arg6[%c0_13, %c0_14], %13 {strides = array<i32>} : memref<8x128xf32, #tpu.memory_space<vmem>>, vector<8x128xf32>,
    return
  }
  func.func @transform_0(%arg0: i32) -> (i32, i32) {
    %c0_i32 = arith.constant 0 : i32
    %c0_i32_0 = arith.constant 0 : i32
    return %arg0, %c0_i32 : i32, i32
  }
  func.func @transform_1(%arg0: i32) -> (i32, i32) {
    %c0_i32 = arith.constant 0 : i32
    %c0_i32_0 = arith.constant 0 : i32
    %c0_i32_1 = arith.constant 0 : i32
    return %c0_i32, %c0_i32_0 : i32, i32
  }
  func.func @transform_2(%arg0: i32) -> (i32, i32) {
    %c0_i32 = arith.constant 0 : i32
    %c0_i32_0 = arith.constant 0 : i32
    %c0_i32_1 = arith.constant 0 : i32
    return %c0_i32, %c0_i32_0 : i32, i32
  }
  func.func @transform_3(%arg0: i32) -> (i32, i32) {
    %c0_i32 = arith.constant 0 : i32
    %c0_i32_0 = arith.constant 0 : i32
    %c0_i32_1 = arith.constant 0 : i32
    return %c0_i32, %c0_i32_0 : i32, i32
  }
  func.func @transform_4(%arg0: i32) -> (i32, i32) {
    %c0_i32 = arith.constant 0 : i32
    %c0_i32_0 = arith.constant 0 : i32
    return %arg0, %c0_i32 : i32, i32
  }
  func.func @transform_5(%arg0: i32) -> (i32, i32) {
    %c0_i32 = arith.constant 0 : i32
    %c0_i32_0 = arith.constant 0 : i32
    return %arg0, %c0_i32 : i32, i32
  }
}

</mosaic_0001>

<llo_original>
// kernel: mixture_component_pallas.1
$region0: #{mixture_component_pallas.1}
  #allocation0 [shape = 'u32[]', space=smem, size = 0x4, offset = 0x4, fixed_abs, tag = 'smem constant byte address 0x4 - core index']
  #allocation1 [shape = 'u32[144,128]{1,0:T(1,128)}', space=vmem, size = 0x12000, scoped, tag = 'internal scratch']
  %s0 = inlined_call_operand.vmem [shape: f32[20,32], index: 0, kind: input, shape index: {}]
  %s1 = inlined_call_operand.vmem [shape: f32[32,32], index: 1, kind: input, shape index: {}]
  %s2 = inlined_call_operand.vmem [shape: f32[32,32], index: 2, kind: input, shape index: {}]
  %s3 = inlined_call_operand.vmem [shape: f32[32,256], index: 3, kind: input, shape index: {}]
  %s4 = inlined_call_operand.vmem [shape: f32[20,128], index: 4, kind: output, shape index: {0}]
  %s5 = inlined_call_operand.vmem [shape: f32[20,128], index: 5, kind: output, shape index: {1}]
  %6 = xla_tuple %s4, %s5
  %s7 = sld [smem:[#allocation0]]
  $region57: #{mixture_component_pallas.1} parent=0
    _
  %s9 = ssub.s32 1, %s7
  %s10 = scalar_select 0, %s9, %s7
  loop: start=0, step=1, limit=5
  $region2: #{mixture_component_pallas.1} parent=0 // loop_pre_header
    _
  $region3: #{mixture_component_pallas.1} parent=0 // loop_header
    %s12 = sphi 0, %s16
    %p13 = scmp.ge.s32.totalorder %s12, 5
    %s22 = sphi 0, %s24
    %s25 = sphi 0, %s22
    %s26 = sphi 0, %s25
    %s42 = sphi 0, %s26
    %s46 = sphi 0, %s46
    %s48 = sphi 0, %s46
    %s49 = sphi 0, %s48
    %s63 = sphi 0, %s49
    %s67 = sphi 0, %s67
    %s69 = sphi 0, %s67
    %s70 = sphi 0, %s69
    %s84 = sphi 0, %s70
    %s88 = sphi 0, %s88
    %s90 = sphi 0, %s88
    %s91 = sphi 0, %s90
    %s105 = sphi 0, %s91
    %s111 = sphi 0, %s113
    %s114 = sphi 0, %s111
    %s115 = sphi 0, %s114
    %s131 = sphi 0, %s115
    %s137 = sphi 0, %s139
    %s140 = sphi 0, %s137
    %s141 = sphi 0, %s140
    %s157 = sphi 0, %s141
  $region4: #{mixture_component_pallas.1} parent=0 // loop_header_branch
    %15 = sbr.rel (%p13) target = $region8
  $region5: #{mixture_component_pallas.1} parent=0 // loop_body
    %s17 = ssub.s32 %s12, 1
    %s18 = ssub.s32 %s12, 2
    %s19 = sadd.s32 %s12, 1
    %s20 = ssub.s32 %s12, %s19
    %p21 = scmp.eq.s32.totalorder %s20, 0
    %s23 = sadd.s32 %s22, 1
    %s24 = scalar_select %p21, %s22, %s23
    %p27 = pneg %p21
    %p28 = scmp.eq.s32.totalorder %s12, 2
    %p29 = por %p27, %p28
    %p30 = scmp.ne.s32.totalorder %s22, %s25
    %p31 = scmp.eq.s32.totalorder %s12, 0
    %p32 = por %p30, %p31
    %p33 = scmp.ne.s32.totalorder %s22, %s25
    %p34 = scmp.eq.s32.totalorder %s17, 2
    %p35 = por %p33, %p34
    %p36 = scmp.ne.s32.totalorder %s25, %s26
    %p37 = scmp.eq.s32.totalorder %s17, 0
    %p38 = por %p36, %p37
    %p39 = scmp.ne.s32.totalorder %s25, %s26
    %p40 = scmp.eq.s32.totalorder %s18, 2
    %p41 = por %p39, %p40
    %p43 = scmp.ne.s32.totalorder %s26, %s42
    %p44 = scmp.eq.s32.totalorder %s18, 0
    %p45 = por %p43, %p44
    %s47 = sadd.s32 %s46, 1
    %p50 = scmp.eq.s32.totalorder %s12, 2
    %p51 = scmp.ne.s32.totalorder %s46, %s48
    %p52 = scmp.eq.s32.totalorder %s12, 0
    %p53 = por %p51, %p52
    %p54 = scmp.ne.s32.totalorder %s46, %s48
    %p55 = scmp.eq.s32.totalorder %s17, 2
    %p56 = por %p54, %p55
    %p57 = scmp.ne.s32.totalorder %s48, %s49
    %p58 = scmp.eq.s32.totalorder %s17, 0
    %p59 = por %p57, %p58
    %p60 = scmp.ne.s32.totalorder %s48, %s49
    %p61 = scmp.eq.s32.totalorder %s18, 2
    %p62 = por %p60, %p61
    %p64 = scmp.ne.s32.totalorder %s49, %s63
    %p65 = scmp.eq.s32.totalorder %s18, 0
    %p66 = por %p64, %p65
    %s68 = sadd.s32 %s67, 1
    %p71 = scmp.eq.s32.totalorder %s12, 2
    %p72 = scmp.ne.s32.totalorder %s67, %s69
    %p73 = scmp.eq.s32.totalorder %s12, 0
    %p74 = por %p72, %p73
    %p75 = scmp.ne.s32.totalorder %s67, %s69
    %p76 = scmp.eq.s32.totalorder %s17, 2
    %p77 = por %p75, %p76
    %p78 = scmp.ne.s32.totalorder %s69, %s70
    %p79 = scmp.eq.s32.totalorder %s17, 0
    %p80 = por %p78, %p79
    %p81 = scmp.ne.s32.totalorder %s69, %s70
    %p82 = scmp.eq.s32.totalorder %s18, 2
    %p83 = por %p81, %p82
    %p85 = scmp.ne.s32.totalorder %s70, %s84
    %p86 = scmp.eq.s32.totalorder %s18, 0
    %p87 = por %p85, %p86
    %s89 = sadd.s32 %s88, 1
    %p92 = scmp.eq.s32.totalorder %s12, 2
    %p93 = scmp.ne.s32.totalorder %s88, %s90
    %p94 = scmp.eq.s32.totalorder %s12, 0
    %p95 = por %p93, %p94
    %p96 = scmp.ne.s32.totalorder %s88, %s90
    %p97 = scmp.eq.s32.totalorder %s17, 2
    %p98 = por %p96, %p97
    %p99 = scmp.ne.s32.totalorder %s90, %s91
    %p100 = scmp.eq.s32.totalorder %s17, 0
    %p101 = por %p99, %p100
    %p102 = scmp.ne.s32.totalorder %s90, %s91
    %p103 = scmp.eq.s32.totalorder %s18, 2
    %p104 = por %p102, %p103
    %p106 = scmp.ne.s32.totalorder %s91, %s105
    %p107 = scmp.eq.s32.totalorder %s18, 0
    %p108 = por %p106, %p107
    %s109 = ssub.s32 %s12, %s19
    %p110 = scmp.eq.s32.totalorder %s109, 0
    %s112 = sadd.s32 %s111, 1
    %s113 = scalar_select %p110, %s111, %s112
    %p116 = pneg %p110
    %p117 = scmp.eq.s32.totalorder %s12, 2
    %p118 = por %p116, %p117
    %p119 = scmp.ne.s32.totalorder %s111, %s114
    %p120 = scmp.eq.s32.totalorder %s12, 0
    %p121 = por %p119, %p120
    %p122 = scmp.ne.s32.totalorder %s111, %s114
    %p123 = scmp.eq.s32.totalorder %s17, 2
    %p124 = por %p122, %p123
    %p125 = scmp.ne.s32.totalorder %s114, %s115
    %p126 = scmp.eq.s32.totalorder %s17, 0
    %p127 = por %p125, %p126
    %p128 = scmp.ne.s32.totalorder %s114, %s115
    %p129 = scmp.eq.s32.totalorder %s18, 2
    %p130 = por %p128, %p129
    %p132 = scmp.ne.s32.totalorder %s115, %s131
    %p133 = scmp.eq.s32.totalorder %s18, 0
    %p134 = por %p132, %p133
    %s135 = ssub.s32 %s12, %s19
    %p136 = scmp.eq.s32.totalorder %s135, 0
    %s138 = sadd.s32 %s137, 1
    %s139 = scalar_select %p136, %s137, %s138
    %p142 = pneg %p136
    %p143 = scmp.eq.s32.totalorder %s12, 2
    %p144 = por %p142, %p143
    %p145 = scmp.ne.s32.totalorder %s137, %s140
    %p146 = scmp.eq.s32.totalorder %s12, 0
    %p147 = por %p145, %p146
    %p148 = scmp.ne.s32.totalorder %s137, %s140
    %p149 = scmp.eq.s32.totalorder %s17, 2
    %p150 = por %p148, %p149
    %p151 = scmp.ne.s32.totalorder %s140, %s141
    %p152 = scmp.eq.s32.totalorder %s17, 0
    %p153 = por %p151, %p152
    %p154 = scmp.ne.s32.totalorder %s140, %s141
    %p155 = scmp.eq.s32.totalorder %s18, 2
    %p156 = por %p154, %p155
    %p158 = scmp.ne.s32.totalorder %s141, %s157
    %p159 = scmp.eq.s32.totalorder %s18, 0
    %p160 = por %p158, %p159
    %p161 = scmp.le.s32.totalorder 1, %s12
    %p162 = scmp.lt.s32.totalorder %s12, 4
    %p163 = pnand %p161, %p162
    %p164 = pneg %p163
    // Predicated region
    $region9: #{mixture_component_pallas.1} parent=5 // pred_check
      _
    $region10: #{mixture_component_pallas.1} parent=5 // pred_check_branch
      %166 = sbr.rel (%p163) target = $region12
    $region11: #{mixture_component_pallas.1} parent=5 // pred_region
      %s167 = ssub.s32 %s12, 1
      // Predicated region
      $region13: #{mixture_component_pallas.1} parent=11 // pred_check
        %p168 = pneg %p59
      $region14: #{mixture_component_pallas.1} parent=11 // pred_check_branch
        %170 = sbr.rel (%p168) target = $region16
      $region15: #{mixture_component_pallas.1} parent=11 // pred_region
        _
      $region16: #{mixture_component_pallas.1} parent=11 // pred_fallthru
        _
      // Predicated region
      $region17: #{mixture_component_pallas.1} parent=11 // pred_check
        %p171 = pneg %p80
      $region18: #{mixture_component_pallas.1} parent=11 // pred_check_branch
        %173 = sbr.rel (%p171) target = $region20
      $region19: #{mixture_component_pallas.1} parent=11 // pred_region
        _
      $region20: #{mixture_component_pallas.1} parent=11 // pred_fallthru
        _
      // Predicated region
      $region21: #{mixture_component_pallas.1} parent=11 // pred_check
        %p174 = pneg %p101
      $region22: #{mixture_component_pallas.1} parent=11 // pred_check_branch
        %176 = sbr.rel (%p174) target = $region24
      $region23: #{mixture_component_pallas.1} parent=11 // pred_region
        _
      $region24: #{mixture_component_pallas.1} parent=11 // pred_fallthru
        _
    $region12: #{mixture_component_pallas.1} parent=5 // pred_fallthru
      _
    %p177 = scmp.lt.s32.totalorder %s12, 3
    // Predicated region
    $region25: #{mixture_component_pallas.1} parent=5 // pred_check
      %p178 = pneg %p177
    $region26: #{mixture_component_pallas.1} parent=5 // pred_check_branch
      %180 = sbr.rel (%p178) target = $region28
    $region27: #{mixture_component_pallas.1} parent=5 // pred_region
      // Predicated region
      $region29: #{mixture_component_pallas.1} parent=27 // pred_check
        %p181 = pneg %p32
      $region30: #{mixture_component_pallas.1} parent=27 // pred_check_branch
        %183 = sbr.rel (%p181) target = $region32
      $region31: #{mixture_component_pallas.1} parent=27 // pred_region
        %p184 = scmp.lt.s32.totalorder %s12, 2
        %s185 = scalar_select %p184, %s12, 2
        %s186 = smul.addr %s185, 8
        %s187 = scalar_lea.vmem %s0, %s186
      $region32: #{mixture_component_pallas.1} parent=27 // pred_fallthru
        _
    $region28: #{mixture_component_pallas.1} parent=5 // pred_fallthru
      _
    %p188 = scmp.le.s32.totalorder 1, %s12
    %p189 = scmp.lt.s32.totalorder %s12, 4
    %p190 = pnand %p188, %p189
    %p191 = pneg %p190
    // Predicated region
    $region33: #{mixture_component_pallas.1} parent=5 // pred_check
      _
    $region34: #{mixture_component_pallas.1} parent=5 // pred_check_branch
      %193 = sbr.rel (%p190) target = $region36
    $region35: #{mixture_component_pallas.1} parent=5 // pred_region
      %s194 = ssub.s32 %s12, 1
      %p195 = scmp.lt.s32.totalorder %s17, 2
      %s196 = scalar_select %p195, %s17, 2
      %s197 = smul.addr %s196, 8
      %s198 = scalar_lea.vmem %s0, %s197
      %p199 = pneg %p38
      %p200 = pneg %p35
      %p201 = pneg %p59
      %p202 = pneg %p56
      %p203 = pneg %p80
      %p204 = pneg %p77
      %p205 = pneg %p101
      %p206 = pneg %p98
      %p207 = pneg %p127
      %p208 = pneg %p124
      %p209 = scmp.lt.s32.totalorder %s17, 2
      %s210 = scalar_select %p209, %s17, 2
      %s211 = smul.addr %s210, 8
      %s212 = scalar_lea.vmem %s4, %s211
      %p213 = pneg %p153
      %p214 = pneg %p150
      %p215 = scmp.lt.s32.totalorder %s17, 2
      %s216 = scalar_select %p215, %s17, 2
      %s217 = smul.addr %s216, 8
      %s218 = scalar_lea.vmem %s5, %s217
      %p219 = scmp.lt.s32.totalorder %s17, 2
      %s220 = scalar_select %p219, %s17, 2
      %s221 = smul.addr %s220, 8
      %s222 = scalar_lea.vmem %s0, %s221
      %p223 = scmp.lt.s32.totalorder %s17, 2
      %s224 = scalar_select %p223, %s17, 2
      %s225 = smul.addr %s224, 8
      %s226 = scalar_lea.vmem %s4, %s225
      %p227 = scmp.lt.s32.totalorder %s17, 2
      %s228 = scalar_select %p227, %s17, 2
      %s229 = smul.addr %s228, 8
      %s230 = scalar_lea.vmem %s5, %s229
      %v231 = vld [vmem:[%s222] sm:$0xff]
      %v232 = vld [vmem:[%s1] sm:$0xff]
      %v233 = vld [vmem:[%s1 + $0x8] sm:$0xff]
      %v234 = vld [vmem:[%s1 + $0x10] sm:$0xff]
      %v235 = vld [vmem:[%s1 + $0x18] sm:$0xff]
      %vm236 = vcmask 261120
      %v238 = vsel %vm236, %v231, 0
      %240 = vmatprep.subr.mxu0 0.0
      %241 = vmatpush1.msra.mxu0 %v232
      %242 = vmatprep.subr.mxu0 0.0
      %243 = vmatpush1.msra.mxu0 %v233
      %244 = vmatprep.subr.mxu0 0.0
      %245 = vmatpush1.msra.mxu0 %v234
      %246 = vmatprep.subr.mxu0 0.0
      %247 = vmatpush1.msra.mxu0 %v235
      %248 = vmatprep.subr.mxu0 0.0
      %249 = vmatpush1.msra.mxu0 0.0
      %250 = vmatprep.subr.mxu0 0.0
      %251 = vmatpush1.msra.mxu0 0.0
      %252 = vmatprep.subr.mxu0 0.0
      %253 = vmatpush1.msra.mxu0 0.0
      %254 = vmatprep.subr.mxu0 0.0
      %255 = vmatpush1.msra.mxu0 0.0
      %256 = vmatprep.subr.mxu0 0.0
      %257 = vmatpush1.msra.mxu0 0.0
      %258 = vmatprep.subr.mxu0 0.0
      %259 = vmatpush1.msra.mxu0 0.0
      %260 = vmatprep.subr.mxu0 0.0
      %261 = vmatpush1.msra.mxu0 0.0
      %262 = vmatprep.subr.mxu0 0.0
      %263 = vmatpush1.msra.mxu0 0.0
      %264 = vmatprep.subr.mxu0 0.0
      %265 = vmatpush1.msra.mxu0 0.0
      %266 = vmatprep.subr.mxu0 0.0
      %267 = vmatpush1.msra.mxu0 0.0
      %268 = vmatprep.subr.mxu0 0.0
      %269 = vmatpush1.msra.mxu0 0.0
      %270 = vmatprep.subr.mxu0 0.0
      %271 = vmatpush1.msra.mxu0 0.0
      %272 = vmatprep.subr.mxu0 0.0
      %273 = vmatpush1.msra.mxu0 0.0
      %274 = vmatprep.subr.mxu0 0.0
      %275 = vmatpush1.msra.mxu0 0.0
      %276 = vmatprep.subr.mxu0 0.0
      %277 = vmatpush1.msra.mxu0 0.0
      %278 = vmatprep.subr.mxu0 0.0
      %279 = vmatpush1.msra.mxu0 0.0
      %280 = vmatprep.subr.mxu0 0.0
      %281 = vmatpush1.msra.mxu0 0.0
      %282 = vmatprep.subr.mxu0 0.0
      %283 = vmatpush1.msra.mxu0 0.0
      %284 = vmatprep.subr.mxu0 0.0
      %285 = vmatpush1.msra.mxu0 0.0
      %286 = vmatprep.subr.mxu0 0.0
      %287 = vmatpush1.msra.mxu0 0.0
      %288 = vmatprep.subr.mxu0 0.0
      %289 = vmatpush1.msra.mxu0 0.0
      %290 = vmatprep.subr.mxu0 0.0
      %291 = vmatpush1.msra.mxu0 0.0
      %292 = vmatprep.subr.mxu0 0.0
      %293 = vmatpush1.msra.mxu0 0.0
      %294 = vmatprep.subr.mxu0 0.0
      %295 = vmatpush1.msra.mxu0 0.0
      %296 = vmatprep.subr.mxu0 0.0
      %297 = vmatpush1.msra.mxu0 0.0
      %298 = vmatprep.subr.mxu0 0.0
      %299 = vmatpush1.msra.mxu0 0.0
      %300 = vmatprep.subr.mxu0 0.0
      %301 = vmatpush1.msra.mxu0 0.0
      %302 = vmatprep.subr.mxu0 0.0
      %303 = vmatpush1.msra.mxu0 0.0
      %304 = vmatprep.mubr.f32.mxu0 0.0
      %305 = vmatmul.mubr.f32.gmra.mrb[0].mxu0 %v238
      %v306 = vpop.f32.mrb[0].mxu0
      %v307 = vadd.f32 0.0, %v306
      %v308 = vpop.f32.mrb[0].mxu0
      %309 = vdwg.mxu0
      %v310 = vmax.f32 %v307, 0.0
      %v311 = vld [vmem:[%s2] sm:$0xff]
      %v312 = vld [vmem:[%s2 + $0x8] sm:$0xff]
      %v313 = vld [vmem:[%s2 + $0x10] sm:$0xff]
      %v314 = vld [vmem:[%s2 + $0x18] sm:$0xff]
      %v316 = vsel %vm236, %v310, 0
      %318 = vmatprep.subr.mxu0 0.0
      %319 = vmatpush1.msra.mxu0 %v311
      %320 = vmatprep.subr.mxu0 0.0
      %321 = vmatpush1.msra.mxu0 %v312
      %322 = vmatprep.subr.mxu0 0.0
      %323 = vmatpush1.msra.mxu0 %v313
      %324 = vmatprep.subr.mxu0 0.0
      %325 = vmatpush1.msra.mxu0 %v314
      %326 = vmatprep.subr.mxu0 0.0
      %327 = vmatpush1.msra.mxu0 0.0
      %328 = vmatprep.subr.mxu0 0.0
      %329 = vmatpush1.msra.mxu0 0.0
      %330 = vmatprep.subr.mxu0 0.0
      %331 = vmatpush1.msra.mxu0 0.0
      %332 = vmatprep.subr.mxu0 0.0
      %333 = vmatpush1.msra.mxu0 0.0
      %334 = vmatprep.subr.mxu0 0.0
      %335 = vmatpush1.msra.mxu0 0.0
      %336 = vmatprep.subr.mxu0 0.0
      %337 = vmatpush1.msra.mxu0 0.0
      %338 = vmatprep.subr.mxu0 0.0
      %339 = vmatpush1.msra.mxu0 0.0
      %340 = vmatprep.subr.mxu0 0.0
      %341 = vmatpush1.msra.mxu0 0.0
      %342 = vmatprep.subr.mxu0 0.0
      %343 = vmatpush1.msra.mxu0 0.0
      %344 = vmatprep.subr.mxu0 0.0
      %345 = vmatpush1.msra.mxu0 0.0
      %346 = vmatprep.subr.mxu0 0.0
      %347 = vmatpush1.msra.mxu0 0.0
      %348 = vmatprep.subr.mxu0 0.0
      %349 = vmatpush1.msra.mxu0 0.0
      %350 = vmatprep.subr.mxu0 0.0
      %351 = vmatpush1.msra.mxu0 0.0
      %352 = vmatprep.subr.mxu0 0.0
      %353 = vmatpush1.msra.mxu0 0.0
      %354 = vmatprep.subr.mxu0 0.0
      %355 = vmatpush1.msra.mxu0 0.0
      %356 = vmatprep.subr.mxu0 0.0
      %357 = vmatpush1.msra.mxu0 0.0
      %358 = vmatprep.subr.mxu0 0.0
      %359 = vmatpush1.msra.mxu0 0.0
      %360 = vmatprep.subr.mxu0 0.0
      %361 = vmatpush1.msra.mxu0 0.0
      %362 = vmatprep.subr.mxu0 0.0
      %363 = vmatpush1.msra.mxu0 0.0
      %364 = vmatprep.subr.mxu0 0.0
      %365 = vmatpush1.msra.mxu0 0.0
      %366 = vmatprep.subr.mxu0 0.0
      %367 = vmatpush1.msra.mxu0 0.0
      %368 = vmatprep.subr.mxu0 0.0
      %369 = vmatpush1.msra.mxu0 0.0
      %370 = vmatprep.subr.mxu0 0.0
      %371 = vmatpush1.msra.mxu0 0.0
      %372 = vmatprep.subr.mxu0 0.0
      %373 = vmatpush1.msra.mxu0 0.0
      %374 = vmatprep.subr.mxu0 0.0
      %375 = vmatpush1.msra.mxu0 0.0
      %376 = vmatprep.subr.mxu0 0.0
      %377 = vmatpush1.msra.mxu0 0.0
      %378 = vmatprep.subr.mxu0 0.0
      %379 = vmatpush1.msra.mxu0 0.0
      %380 = vmatprep.subr.mxu0 0.0
      %381 = vmatpush1.msra.mxu0 0.0
      %382 = vmatprep.mubr.f32.mxu0 0.0
      %383 = vmatmul.mubr.f32.gmra.mrb[0].mxu0 %v316
      %v384 = vpop.f32.mrb[0].mxu0
      %v385 = vadd.f32 0.0, %v384
      %v386 = vpop.f32.mrb[0].mxu0
      %387 = vdwg.mxu0
      %v388 = vmax.f32 %v385, 0.0
      %v389 = vld [vmem:[%s3] sm:$0xff]
      %v390 = vld [vmem:[%s3 + $0x8] sm:$0xff]
      %v391 = vld [vmem:[%s3 + $0x10] sm:$0xff]
      %v392 = vld [vmem:[%s3 + $0x18] sm:$0xff]
      %v393 = vld [vmem:[%s3 + $0x20] sm:$0xff]
      %v394 = vld [vmem:[%s3 + $0x28] sm:$0xff]
      %v395 = vld [vmem:[%s3 + $0x30] sm:$0xff]
      %v396 = vld [vmem:[%s3 + $0x38] sm:$0xff]
      %v398 = vsel %vm236, %v388, 0
      %400 = vmatprep.subr.mxu0 %v390
      %401 = vmatpush1.msra.mxu0 %v389
      %402 = vmatprep.subr.mxu0 %v392
      %403 = vmatpush1.msra.mxu0 %v391
      %404 = vmatprep.subr.mxu0 %v394
      %405 = vmatpush1.msra.mxu0 %v393
      %406 = vmatprep.subr.mxu0 %v396
      %407 = vmatpush1.msra.mxu0 %v395
      %408 = vmatprep.subr.mxu0 0.0
      %409 = vmatpush1.msra.mxu0 0.0
      %410 = vmatprep.subr.mxu0 0.0
      %411 = vmatpush1.msra.mxu0 0.0
      %412 = vmatprep.subr.mxu0 0.0
      %413 = vmatpush1.msra.mxu0 0.0
      %414 = vmatprep.subr.mxu0 0.0
      %415 = vmatpush1.msra.mxu0 0.0
      %416 = vmatprep.subr.mxu0 0.0
      %417 = vmatpush1.msra.mxu0 0.0
      %418 = vmatprep.subr.mxu0 0.0
      %419 = vmatpush1.msra.mxu0 0.0
      %420 = vmatprep.subr.mxu0 0.0
      %421 = vmatpush1.msra.mxu0 0.0
      %422 = vmatprep.subr.mxu0 0.0
      %423 = vmatpush1.msra.mxu0 0.0
      %424 = vmatprep.subr.mxu0 0.0
      %425 = vmatpush1.msra.mxu0 0.0
      %426 = vmatprep.subr.mxu0 0.0
      %427 = vmatpush1.msra.mxu0 0.0
      %428 = vmatprep.subr.mxu0 0.0
      %429 = vmatpush1.msra.mxu0 0.0
      %430 = vmatprep.subr.mxu0 0.0
      %431 = vmatpush1.msra.mxu0 0.0
      %432 = vmatprep.subr.mxu0 0.0
      %433 = vmatpush1.msra.mxu0 0.0
      %434 = vmatprep.subr.mxu0 0.0
      %435 = vmatpush1.msra.mxu0 0.0
      %436 = vmatprep.subr.mxu0 0.0
      %437 = vmatpush1.msra.mxu0 0.0
      %438 = vmatprep.subr.mxu0 0.0
      %439 = vmatpush1.msra.mxu0 0.0
      %440 = vmatprep.subr.mxu0 0.0
      %441 = vmatpush1.msra.mxu0 0.0
      %442 = vmatprep.subr.mxu0 0.0
      %443 = vmatpush1.msra.mxu0 0.0
      %444 = vmatprep.subr.mxu0 0.0
      %445 = vmatpush1.msra.mxu0 0.0
      %446 = vmatprep.subr.mxu0 0.0
      %447 = vmatpush1.msra.mxu0 0.0
      %448 = vmatprep.subr.mxu0 0.0
      %449 = vmatpush1.msra.mxu0 0.0
      %450 = vmatprep.subr.mxu0 0.0
      %451 = vmatpush1.msra.mxu0 0.0
      %452 = vmatprep.subr.mxu0 0.0
      %453 = vmatpush1.msra.mxu0 0.0
      %454 = vmatprep.subr.mxu0 0.0
      %455 = vmatpush1.msra.mxu0 0.0
      %456 = vmatprep.subr.mxu0 0.0
      %457 = vmatpush1.msra.mxu0 0.0
      %458 = vmatprep.subr.mxu0 0.0
      %459 = vmatpush1.msra.mxu0 0.0
      %460 = vmatprep.subr.mxu0 0.0
      %461 = vmatpush1.msra.mxu0 0.0
      %462 = vmatprep.subr.mxu0 0.0
      %463 = vmatpush1.msra.mxu0 0.0
      %464 = vmatprep.mubr.f32.mxu0 0.0
      %465 = vmatmul.mubr.f32.gmra.mrb[0].mxu0 %v398
      %v466 = vpop.f32.mrb[0].mxu0
      %v467 = vadd.f32 0.0, %v466
      %v468 = vpop.f32.mrb[0].mxu0
      %v469 = vadd.f32 0.0, %v468
      %470 = vdwg.mxu0
      %471 = vst [vmem:[%s226] sm:$0xff] %v467
      %472 = vst [vmem:[%s230] sm:$0xff] %v469
      %p473 = scmp.lt.s32.totalorder %s17, 2
      %s474 = scalar_select %p473, %s17, 2
      %s475 = smul.addr %s474, 8
      %s476 = scalar_lea.vmem %s4, %s475
      %p477 = scmp.lt.s32.totalorder %s17, 2
      %s478 = scalar_select %p477, %s17, 2
      %s479 = smul.addr %s478, 8
      %s480 = scalar_lea.vmem %s5, %s479
      // Predicated region
      $region37: #{mixture_component_pallas.1} parent=35 // pred_check
        %p481 = pneg %p124
      $region38: #{mixture_component_pallas.1} parent=35 // pred_check_branch
        %483 = sbr.rel (%p481) target = $region40
      $region39: #{mixture_component_pallas.1} parent=35 // pred_region
        _
      $region40: #{mixture_component_pallas.1} parent=35 // pred_fallthru
        _
      // Predicated region
      $region41: #{mixture_component_pallas.1} parent=35 // pred_check
        %p484 = pneg %p150
      $region42: #{mixture_component_pallas.1} parent=35 // pred_check_branch
        %486 = sbr.rel (%p484) target = $region44
      $region43: #{mixture_component_pallas.1} parent=35 // pred_region
        _
      $region44: #{mixture_component_pallas.1} parent=35 // pred_fallthru
        _
    $region36: #{mixture_component_pallas.1} parent=5 // pred_fallthru
      _
    %p487 = scmp.le.s32.totalorder 2, %s12
    // Predicated region
    $region45: #{mixture_component_pallas.1} parent=5 // pred_check
      %p488 = pneg %p487
    $region46: #{mixture_component_pallas.1} parent=5 // pred_check_branch
      %490 = sbr.rel (%p488) target = $region48
    $region47: #{mixture_component_pallas.1} parent=5 // pred_region
      %s491 = ssub.s32 %s12, 2
      // Predicated region
      $region49: #{mixture_component_pallas.1} parent=47 // pred_check
        %p492 = pneg %p130
      $region50: #{mixture_component_pallas.1} parent=47 // pred_check_branch
        %494 = sbr.rel (%p492) target = $region52
      $region51: #{mixture_component_pallas.1} parent=47 // pred_region
        %p495 = scmp.lt.s32.totalorder %s18, 2
        %s496 = scalar_select %p495, %s18, 2
        %s497 = smul.addr %s496, 8
        %s498 = scalar_lea.vmem %s4, %s497
      $region52: #{mixture_component_pallas.1} parent=47 // pred_fallthru
        _
      // Predicated region
      $region53: #{mixture_component_pallas.1} parent=47 // pred_check
        %p499 = pneg %p156
      $region54: #{mixture_component_pallas.1} parent=47 // pred_check_branch
        %501 = sbr.rel (%p499) target = $region56
      $region55: #{mixture_component_pallas.1} parent=47 // pred_region
        %p502 = scmp.lt.s32.totalorder %s18, 2
        %s503 = scalar_select %p502, %s18, 2
        %s504 = smul.addr %s503, 8
        %s505 = scalar_lea.vmem %s5, %s504
      $region56: #{mixture_component_pallas.1} parent=47 // pred_fallthru
        _
    $region48: #{mixture_component_pallas.1} parent=5 // pred_fallthru
      _
  $region6: #{mixture_component_pallas.1} parent=0 // loop_footer
    %s16 = sadd.s32 1, %s12
  $region7: #{mixture_component_pallas.1} parent=0 // loop_footer_branch
    %11 = sbr.rel target = $region3
  $region8: #{mixture_component_pallas.1} parent=0 // loop_exit
    _

</llo_original>
